<compile_context>
chip_gen: v7x
topology: tpu7x:2x2x1
jax: 0.10.0
libtpu: 0.0.40
codegen_flags: <defaults>
</compile_context>

<pallas_src>
import functools
import math

import numpy as np
import jax
import jax.numpy as jnp
from jax.experimental import pallas as pl
from jax.experimental.pallas import tpu as pltpu

_MIB = 1024 * 1024


def _dot_attention_kernel(q_ref, k_ref, v_ref, seg_ref, segt_ref, o_ref):
    """Lane-dense path. q/k/v/o refs are (TB, N) with N = S*D.

    seg_ref:  (N, S) f32, entry = 1/sqrt(dim) iff lane j belongs to row j//D == s.
    segt_ref: (S, N) f32, 0/1 transpose-like broadcast matrix.
    """
    q = q_ref[...].astype(jnp.float32)
    k = k_ref[...].astype(jnp.float32)
    v = v_ref[...].astype(jnp.float32)

    # Per-row dot product q.k: dense VPU elementwise product, then a segment
    # sum over each group of D lanes on the (otherwise idle) MXU -> (TB, S).
    # seg is pre-multiplied by 1/sqrt(dim), so scores arrive already scaled.
    prod = q * k
    scores = jnp.dot(prod, seg_ref[...], preferred_element_type=jnp.float32)

    # Softmax over the sequence axis (dense last-axis lane reductions).
    m = jnp.max(scores, axis=-1, keepdims=True)        # (TB, 1)
    e = jnp.exp(scores - m)                            # (TB, S)
    denom = jnp.sum(e, axis=-1, keepdims=True)         # (TB, 1)
    w = e * pl.reciprocal(denom, approx=False)         # exact; wall-clock free here

    # Broadcast each weight over its D lanes via the MXU: (TB,S)@(S,N)->(TB,N).
    w_full = jnp.dot(w, segt_ref[...], preferred_element_type=jnp.float32)
    o_ref[...] = (w_full * v).astype(o_ref.dtype)


def _dot_attention_kernel_fallback(q_ref, k_ref, v_ref, o_ref, *, scale):
    """(TB, S, D)-blocked fallback for large S, where the segment matrices
    would not fit in VMEM / would make the kernel MXU-bound."""
    q = q_ref[...].astype(jnp.float32)
    k = k_ref[...].astype(jnp.float32)
    v = v_ref[...].astype(jnp.float32)
    scores = jnp.sum(q * k, axis=-1, keepdims=True) * scale   # (TB, S, 1)
    m = jnp.max(scores, axis=1, keepdims=True)
    e = jnp.exp(scores - m)
    denom = jnp.sum(e, axis=1, keepdims=True)
    w = e * pl.reciprocal(denom, approx=False)
    o_ref[...] = (w * v).astype(o_ref.dtype)


def _vmem_budget_and_limit():
    """Generation-aware (budget_for_tiling, vmem_limit_bytes)."""
    try:
        cap = int(pltpu.get_tpu_info().vmem_capacity_bytes)
    except Exception:
        cap = 64 * _MIB  # conservative: v7x-class per-core VMEM
    # v5e/v6e (128 MiB physical) -> budget 64 MiB, limit 96 MiB;
    # v7x (64 MiB physical)      -> budget 32 MiB, limit 48 MiB.
    budget = min(cap // 2, 64 * _MIB)
    limit = max(32 * _MIB, min(budget + budget // 2, cap - 8 * _MIB))
    return budget, limit


def _round_down8(x):
    return max(8, (x // 8) * 8)


def _choose_batch_tile(batch, n_flat, seq, itemsize, budget, resident_bytes):
    if batch <= 8:
        # Block sublane dim must be a multiple of 8 or the full batch: too few
        # rows to tile, so a single grid step.
        return batch
    avail = max(budget - resident_bytes, _MIB)
    # Per batch-row footprint: 4 double-buffered I/O operands plus the f32
    # in-kernel temporaries (upcasts / prod / w_full) and small (S,) strips.
    bytes_per_row = 4 * 2 * n_flat * itemsize + 4 * n_flat * 4 + 8 * seq * 4
    vmem_rows = _round_down8(avail // bytes_per_row)
    # ~4 MiB per-operand blocks already saturate HBM; larger blocks only
    # starve the grid of steps.
    size_rows = _round_down8((4 * _MIB) // max(1, n_flat * itemsize))
    # Target >= 8 grid steps (>= 4 per TensorCore on v7x) so the pipeline can
    # hide the first fetch / last writeback and both v7x cores get work.
    target_rows = _round_down8(pl.cdiv(batch, 8))
    tb = min(vmem_rows, size_rows, target_rows)
    # TODO(synk): if even 8 rows exceed the VMEM budget (very large S*D),
    # switch to a two-pass online-softmax scheme with a trailing "arbitrary"
    # S grid axis instead of relying on the 8-row floor here.
    return min(tb, batch)


def dot_attention(q, k, v, dim, *, io_dtype=None):
    B, S, D = q.shape
    N = S * D
    scale = 1.0 / math.sqrt(float(dim))
    io_dtype = jnp.dtype(io_dtype) if io_dtype is not None else jnp.dtype(q.dtype)
    itemsize = io_dtype.itemsize

    budget, vmem_limit = _vmem_budget_and_limit()
    compiler_params = pltpu.CompilerParams(
        dimension_semantics=("parallel",),
        vmem_limit_bytes=vmem_limit,
    )

    # Gate the segment-matrix trick on its VMEM/FLOP cost (grows as S^2 * D).
    seg_total_bytes = 2 * N * S * 4
    use_seg_path = seg_total_bytes <= 4 * _MIB

    if use_seg_path:
        # Lane-dense I/O layout: collapse (S, D) -> N so DMAs, loads and stores
        # are full-width rather than masked partial vector ops when D < 128.
        qf = q.reshape(B, N).astype(io_dtype)
        kf = k.reshape(B, N).astype(io_dtype)
        vf = v.reshape(B, N).astype(io_dtype)

        # Loop-invariant 0/1 segment matrices, hoisted out of the kernel and
        # pre-multiplied by the softmax scale (built once, host-side numpy).
        grp = np.arange(N, dtype=np.int32) // D
        seg = (grp[:, None] == np.arange(S, dtype=np.int32)[None, :])
        seg = jnp.asarray(seg.astype(np.float32) * np.float32(scale))           # (N, S)
        seg_t = (np.arange(S, dtype=np.int32)[:, None] == grp[None, :])
        seg_t = jnp.asarray(seg_t.astype(np.float32))                            # (S, N)

        # Resident cost of the (double-buffered) constant inputs.
        resident = 2 * seg_total_bytes
        TB = _choose_batch_tile(B, N, S, itemsize, budget, resident)
        grid = (pl.cdiv(B, TB),)

        row_spec = pl.BlockSpec((TB, N), lambda i: (i, 0))
        out_flat = pl.pallas_call(
            _dot_attention_kernel,
            out_shape=jax.ShapeDtypeStruct((B, N), io_dtype),
            grid_spec=pltpu.PrefetchScalarGridSpec(
                num_scalar_prefetch=0,
                grid=grid,
                in_specs=[row_spec, row_spec, row_spec,
                          pl.BlockSpec((N, S), lambda i: (0, 0)),   # resident constant
                          pl.BlockSpec((S, N), lambda i: (0, 0))],  # resident constant
                out_specs=pl.BlockSpec((TB, N), lambda i: (i, 0)),
            ),
            compiler_params=compiler_params,
        )(qf, kf, vf, seg, seg_t)
        return out_flat.reshape(B, S, D)

    # Large-S fallback: plain (TB, S, D) blocks. (D < 128 would make the
    # stores masked, but at this size the kernel is dominated by row DMAs.)
    qf = q.astype(io_dtype)
    kf = k.astype(io_dtype)
    vf = v.astype(io_dtype)
    TB = _choose_batch_tile(B, N, S, itemsize, budget, 0)
    grid = (pl.cdiv(B, TB),)
    blk = pl.BlockSpec((TB, S, D), lambda i: (i, 0, 0))
    kernel = functools.partial(_dot_attention_kernel_fallback, scale=scale)
    out = pl.pallas_call(
        kernel,
        out_shape=jax.ShapeDtypeStruct((B, S, D), io_dtype),
        grid_spec=pltpu.PrefetchScalarGridSpec(
            num_scalar_prefetch=0,
            grid=grid,
            in_specs=[blk, blk, blk],
            out_specs=blk,
        ),
        compiler_params=compiler_params,
    )(qf, kf, vf)
    return out


def dot_attention_ref(q, k, v, dim):
    # Pure-JAX reference mirroring the PyTorch forward exactly.
    scale = 1.0 / math.sqrt(float(dim))
    scores = jnp.sum(q * k, axis=-1, keepdims=True) * scale   # [B, S, 1]
    w = jax.nn.softmax(scores, axis=1)                        # softmax over S
    return w * v


if __name__ == "__main__":
    B, S, D = 2, 8, 32
    dim = D  # deterministic "parameter" from __init__ (default 0 would be degenerate)

    key = jax.random.PRNGKey(0)
    kq, kk, kv = jax.random.split(key, 3)
    q = jax.random.normal(kq, (B, S, D), dtype=jnp.float32)
    k = jax.random.normal(kk, (B, S, D), dtype=jnp.float32)
    v = jax.random.normal(kv, (B, S, D), dtype=jnp.float32)

    out = jax.block_until_ready(dot_attention(q, k, v, dim))
    ref = dot_attention_ref(q, k, v, dim)

    assert out.shape == (B, S, D)
    # Exact softmax reciprocal -> tight f32 tolerances (MXU f32 passes only).
    assert jnp.allclose(out, ref, atol=1e-4, rtol=1e-4), float(jnp.max(jnp.abs(out - ref)))

    print("KERNEL_OK")
</pallas_src>

<mosaic_0001>
module attributes {stable_mosaic.version = 11 : i64} {
  func.func @_dot_attention_kernel(%arg0: i32, %arg1: memref<2x256xf32, #tpu.memory_space<vmem>>, %arg2: memref<2x256xf32, #tpu.memory_space<vmem>>, %arg3: memref<2x256xf32, #tpu.memory_space<vmem>>, %arg4: memref<256x8xf32, #tpu.memory_space<vmem>>, %arg5: memref<8x256xf32, #tpu.memory_space<vmem>>, %arg6: memref<2x256xf32, #tpu.memory_space<vmem>>) attributes {dimension_semantics = [#tpu.dimension_semantics<parallel>], iteration_bounds = array<i64: 1>, scalar_prefetch = 0 : i64, scratch_operands = 0 : i64, tpu.core_type = #tpu.core_type<tc>, window_params = [{transform_indices = @transform_0, window_bounds = array<i64: 2, 256>}, {transform_indices = @transform_1, window_bounds = array<i64: 2, 256>}, {transform_indices = @transform_2, window_bounds = array<i64: 2, 256>}, {pipeline_mode = #tpu.pipeline_mode<synchronous>, transform_indices = @transform_3, window_bounds = array<i64: 256, 8>}, {pipeline_mode = #tpu.pipeline_mode<synchronous>, transform_indices = @transform_4, window_bounds = array<i64: 8, 256>}, {transform_indices = @transform_5, window_bounds = array<i64: 2, 256>}]} {
    %c0 = arith.constant 0 : index
    %c0_0 = arith.constant 0 : index
    %0 = vector.load %arg1[%c0, %c0_0] : memref<2x256xf32, #tpu.memory_space<vmem>>, vector<2x256xf32>
    %c0_1 = arith.constant 0 : index
    %c0_2 = arith.constant 0 : index
    %1 = vector.load %arg2[%c0_1, %c0_2] : memref<2x256xf32, #tpu.memory_space<vmem>>, vector<2x256xf32>
    %c0_3 = arith.constant 0 : index
    %c0_4 = arith.constant 0 : index
    %2 = vector.load %arg3[%c0_3, %c0_4] : memref<2x256xf32, #tpu.memory_space<vmem>>, vector<2x256xf32>
    %3 = arith.mulf %0, %1 : vector<2x256xf32>
    %c0_5 = arith.constant 0 : index
    %c0_6 = arith.constant 0 : index
    %4 = vector.load %arg4[%c0_5, %c0_6] : memref<256x8xf32, #tpu.memory_space<vmem>>, vector<256x8xf32>
    %cst = arith.constant dense<0.000000e+00> : vector<2x8xf32>
    %5 = tpu.matmul %3, %4, %cst {dimension_numbers = #tpu.dot_dimension_numbers<[1], [0], [0], [1], [0, 0, 1, 1], [], []>} : vector<2x256xf32>, vector<256x8xf32>, vector<2x8xf32> -> vector<2x8xf32>
    %cst_7 = arith.constant dense<0xFF800000> : vector<2xf32>
    %6 = vector.multi_reduction <maximumf>, %5, %cst_7 [1] : vector<2x8xf32> to vector<2xf32>
    %7 = vector.shape_cast %6 : vector<2xf32> to vector<2x1xf32>
    %8 = vector.broadcast %7 : vector<2x1xf32> to vector<2x8xf32>
    %9 = arith.subf %5, %8 : vector<2x8xf32>
    %10 = math.exp %9 : vector<2x8xf32>
    %cst_8 = arith.constant dense<0.000000e+00> : vector<2xf32>
    %11 = vector.multi_reduction <add>, %10, %cst_8 [1] : vector<2x8xf32> to vector<2xf32>
    %12 = vector.shape_cast %11 : vector<2xf32> to vector<2x1xf32>
    %13 = tpu.reciprocal %12 : vector<2x1xf32> -> vector<2x1xf32>
    %14 = vector.broadcast %13 : vector<2x1xf32> to vector<2x8xf32>
    %15 = arith.mulf %10, %14 : vector<2x8xf32>
    %c0_9 = arith.constant 0 : index
    %c0_10 = arith.constant 0 : index
    %16 = vector.load %arg5[%c0_9, %c0_10] : memref<8x256xf32, #tpu.memory_space<vmem>>, vector<8x256xf32>
    %cst_11 = arith.constant dense<0.000000e+00> : vector<2x256xf32>
    %17 = tpu.matmul %15, %16, %cst_11 {dimension_numbers = #tpu.dot_dimension_numbers<[1], [0], [0], [1], [0, 0, 1, 1], [], []>} : vector<2x8xf32>, vector<8x256xf32>, vector<2x256xf32> -> vector<2x256xf32>
    %18 = arith.mulf %17, %2 : vector<2x256xf32>
    %c0_12 = arith.constant 0 : index
    %c0_13 = arith.constant 0 : index
    %19 = vector.load %arg6[%c0_12, %c0_13] : memref<2x256xf32, #tpu.memory_space<vmem>>, vector<2x256xf32>
    tpu.vector_store %arg6[%c0_12, %c0_13], %18 {strides = array<i32>} : memref<2x256xf32, #tpu.memory_space<vmem>>, vector<2x256xf32>,
    return
  }
  func.func @transform_0(%arg0: i32) -> (i32, i32) {
    %c0_i32 = arith.constant 0 : i32
    %c0_i32_0 = arith.constant 0 : i32
    return %arg0, %c0_i32 : i32, i32
  }
  func.func @transform_1(%arg0: i32) -> (i32, i32) {
    %c0_i32 = arith.constant 0 : i32
    %c0_i32_0 = arith.constant 0 : i32
    return %arg0, %c0_i32 : i32, i32
  }
  func.func @transform_2(%arg0: i32) -> (i32, i32) {
    %c0_i32 = arith.constant 0 : i32
    %c0_i32_0 = arith.constant 0 : i32
    return %arg0, %c0_i32 : i32, i32
  }
  func.func @transform_3(%arg0: i32) -> (i32, i32) {
    %c0_i32 = arith.constant 0 : i32
    %c0_i32_0 = arith.constant 0 : i32
    %c0_i32_1 = arith.constant 0 : i32
    return %c0_i32, %c0_i32_0 : i32, i32
  }
  func.func @transform_4(%arg0: i32) -> (i32, i32) {
    %c0_i32 = arith.constant 0 : i32
    %c0_i32_0 = arith.constant 0 : i32
    %c0_i32_1 = arith.constant 0 : i32
    return %c0_i32, %c0_i32_0 : i32, i32
  }
  func.func @transform_5(%arg0: i32) -> (i32, i32) {
    %c0_i32 = arith.constant 0 : i32
    %c0_i32_0 = arith.constant 0 : i32
    return %arg0, %c0_i32 : i32, i32
  }
}

</mosaic_0001>

<llo_original>
// kernel: tpu_custom_call.1
$region0: #{tpu_custom_call.1}
  #allocation0 [shape = 'u32[]', space=smem, size = 0x4, offset = 0x4, fixed_abs, tag = 'smem constant byte address 0x4 - core index']
  #allocation1 [shape = 'u32[144,128]{1,0:T(1,128)}', space=vmem, size = 0x12000, scoped, tag = 'internal scratch']
  %s0 = inlined_call_operand.vmem [shape: f32[2,256], index: 0, kind: input, shape index: {}]
  %s1 = inlined_call_operand.vmem [shape: f32[2,256], index: 1, kind: input, shape index: {}]
  %s2 = inlined_call_operand.vmem [shape: f32[2,256], index: 2, kind: input, shape index: {}]
  %s3 = inlined_call_operand.vmem [shape: f32[256,8], index: 3, kind: input, shape index: {}]
  %s4 = inlined_call_operand.vmem [shape: f32[8,256], index: 4, kind: input, shape index: {}]
  %s5 = inlined_call_operand.hbm [shape: f32[2,256], index: 5, kind: output, shape index: {}]
  %s6 = sld [smem:[#allocation0]]
  $region30: #{tpu_custom_call.1} parent=0
    _
  %s8 = ssub.s32 1, %s6
  %s9 = scalar_select 0, %s8, %s6
  $region1: #{tpu_custom_call.1} parent=0
    #allocation2 [shape = 'u8[2048]{0}', space=vmem, size = 0x800, scoped, tag = 'output window, operand 0, single buffered']
    #allocation3 [shape = 's32[1]{0}', space=sflag, size = 0x4, scoped, tag = 'scoped memory for tpu_custom_call.1']
    %10 = vsyncpa [#allocation3], 0
    // Predicated region
    $region2: #{tpu_custom_call.1} parent=1 // pred_check
      _
    $region3: #{tpu_custom_call.1} parent=1 // pred_check_branch
      %12 = sbr.rel (0) target = $region5
    $region4: #{tpu_custom_call.1} parent=1 // pred_region
      _
    $region5: #{tpu_custom_call.1} parent=1 // pred_fallthru
      _
    // Predicated region
    $region6: #{tpu_custom_call.1} parent=1 // pred_check
      _
    $region7: #{tpu_custom_call.1} parent=1 // pred_check_branch
      %14 = sbr.rel (0) target = $region9
    $region8: #{tpu_custom_call.1} parent=1 // pred_region
      _
    $region9: #{tpu_custom_call.1} parent=1 // pred_fallthru
      _
    // Predicated region
    $region10: #{tpu_custom_call.1} parent=1 // pred_check
      _
    $region11: #{tpu_custom_call.1} parent=1 // pred_check_branch
      %16 = sbr.rel (0) target = $region13
    $region12: #{tpu_custom_call.1} parent=1 // pred_region
      _
    $region13: #{tpu_custom_call.1} parent=1 // pred_fallthru
      _
    // Predicated region
    $region14: #{tpu_custom_call.1} parent=1 // pred_check
      _
    $region15: #{tpu_custom_call.1} parent=1 // pred_check_branch
      %18 = sbr.rel (0) target = $region17
    $region16: #{tpu_custom_call.1} parent=1 // pred_region
      _
    $region17: #{tpu_custom_call.1} parent=1 // pred_fallthru
      _
    // Predicated region
    $region18: #{tpu_custom_call.1} parent=1 // pred_check
      _
    $region19: #{tpu_custom_call.1} parent=1 // pred_check_branch
      %20 = sbr.rel (0) target = $region21
    $region20: #{tpu_custom_call.1} parent=1 // pred_region
      _
    $region21: #{tpu_custom_call.1} parent=1 // pred_fallthru
      _
    %v21 = vld [vmem:[%s0] sm:$0xf]
    %v22 = vld [vmem:[%s1] sm:$0xf]
    %v23 = vld [vmem:[%s2] sm:$0xf]
    %v24 = vmul.f32 %v21, %v22
    %v25 = vld [vmem:[%s3] sm:$0xff]
    %v26 = vld [vmem:[%s3 + $0x8] sm:$0xff]
    %v27 = vld [vmem:[%s3 + $0x10] sm:$0xff]
    %v28 = vld [vmem:[%s3 + $0x18] sm:$0xff]
    %v29 = vld [vmem:[%s3 + $0x20] sm:$0xff]
    %v30 = vld [vmem:[%s3 + $0x28] sm:$0xff]
    %v31 = vld [vmem:[%s3 + $0x30] sm:$0xff]
    %v32 = vld [vmem:[%s3 + $0x38] sm:$0xff]
    %v33 = vld [vmem:[%s3 + $0x40] sm:$0xff]
    %v34 = vld [vmem:[%s3 + $0x48] sm:$0xff]
    %v35 = vld [vmem:[%s3 + $0x50] sm:$0xff]
    %v36 = vld [vmem:[%s3 + $0x58] sm:$0xff]
    %v37 = vld [vmem:[%s3 + $0x60] sm:$0xff]
    %v38 = vld [vmem:[%s3 + $0x68] sm:$0xff]
    %v39 = vld [vmem:[%s3 + $0x70] sm:$0xff]
    %v40 = vld [vmem:[%s3 + $0x78] sm:$0xff]
    %v41 = vld [vmem:[%s3 + $0x80] sm:$0xff]
    %v42 = vld [vmem:[%s3 + $0x88] sm:$0xff]
    %v43 = vld [vmem:[%s3 + $0x90] sm:$0xff]
    %v44 = vld [vmem:[%s3 + $0x98] sm:$0xff]
    %v45 = vld [vmem:[%s3 + $0xa0] sm:$0xff]
    %v46 = vld [vmem:[%s3 + $0xa8] sm:$0xff]
    %v47 = vld [vmem:[%s3 + $0xb0] sm:$0xff]
    %v48 = vld [vmem:[%s3 + $0xb8] sm:$0xff]
    %v49 = vld [vmem:[%s3 + $0xc0] sm:$0xff]
    %v50 = vld [vmem:[%s3 + $0xc8] sm:$0xff]
    %v51 = vld [vmem:[%s3 + $0xd0] sm:$0xff]
    %v52 = vld [vmem:[%s3 + $0xd8] sm:$0xff]
    %v53 = vld [vmem:[%s3 + $0xe0] sm:$0xff]
    %v54 = vld [vmem:[%s3 + $0xe8] sm:$0xff]
    %v55 = vld [vmem:[%s3 + $0xf0] sm:$0xff]
    %v56 = vld [vmem:[%s3 + $0xf8] sm:$0xff]
    %v59 = vunpack.c.l.s4 1983009808
    %v60 = vunpack.c.0.s8 %v59
    %v61 = vlaneseq
    %v62 = vshrl.u32 %v61, 7
    %v63 = vsub.s32 %v60, %v62
    %v64 = vrot.slane %v24, %v63
    %v65 = vcombine.high %v64, %v64
    %68 = vmatprep.subr.mxu0 0.0
    %69 = vmatpush1.msra.mxu0 %v25
    %70 = vmatprep.subr.mxu0 0.0
    %71 = vmatpush1.msra.mxu0 %v26
    %72 = vmatprep.subr.mxu0 0.0
    %73 = vmatpush1.msra.mxu0 %v27
    %74 = vmatprep.subr.mxu0 0.0
    %75 = vmatpush1.msra.mxu0 %v28
    %76 = vmatprep.subr.mxu0 0.0
    %77 = vmatpush1.msra.mxu0 %v29
    %78 = vmatprep.subr.mxu0 0.0
    %79 = vmatpush1.msra.mxu0 %v30
    %80 = vmatprep.subr.mxu0 0.0
    %81 = vmatpush1.msra.mxu0 %v31
    %82 = vmatprep.subr.mxu0 0.0
    %83 = vmatpush1.msra.mxu0 %v32
    %84 = vmatprep.subr.mxu0 0.0
    %85 = vmatpush1.msra.mxu0 %v33
    %86 = vmatprep.subr.mxu0 0.0
    %87 = vmatpush1.msra.mxu0 %v34
    %88 = vmatprep.subr.mxu0 0.0
    %89 = vmatpush1.msra.mxu0 %v35
    %90 = vmatprep.subr.mxu0 0.0
    %91 = vmatpush1.msra.mxu0 %v36
    %92 = vmatprep.subr.mxu0 0.0
    %93 = vmatpush1.msra.mxu0 %v37
    %94 = vmatprep.subr.mxu0 0.0
    %95 = vmatpush1.msra.mxu0 %v38
    %96 = vmatprep.subr.mxu0 0.0
    %97 = vmatpush1.msra.mxu0 %v39
    %98 = vmatprep.subr.mxu0 0.0
    %99 = vmatpush1.msra.mxu0 %v40
    %100 = vmatprep.subr.mxu0 0.0
    %101 = vmatpush1.msra.mxu0 %v41
    %102 = vmatprep.subr.mxu0 0.0
    %103 = vmatpush1.msra.mxu0 %v42
    %104 = vmatprep.subr.mxu0 0.0
    %105 = vmatpush1.msra.mxu0 %v43
    %106 = vmatprep.subr.mxu0 0.0
    %107 = vmatpush1.msra.mxu0 %v44
    %108 = vmatprep.subr.mxu0 0.0
    %109 = vmatpush1.msra.mxu0 %v45
    %110 = vmatprep.subr.mxu0 0.0
    %111 = vmatpush1.msra.mxu0 %v46
    %112 = vmatprep.subr.mxu0 0.0
    %113 = vmatpush1.msra.mxu0 %v47
    %114 = vmatprep.subr.mxu0 0.0
    %115 = vmatpush1.msra.mxu0 %v48
    %116 = vmatprep.subr.mxu0 0.0
    %117 = vmatpush1.msra.mxu0 %v49
    %118 = vmatprep.subr.mxu0 0.0
    %119 = vmatpush1.msra.mxu0 %v50
    %120 = vmatprep.subr.mxu0 0.0
    %121 = vmatpush1.msra.mxu0 %v51
    %122 = vmatprep.subr.mxu0 0.0
    %123 = vmatpush1.msra.mxu0 %v52
    %124 = vmatprep.subr.mxu0 0.0
    %125 = vmatpush1.msra.mxu0 %v53
    %126 = vmatprep.subr.mxu0 0.0
    %127 = vmatpush1.msra.mxu0 %v54
    %128 = vmatprep.subr.mxu0 0.0
    %129 = vmatpush1.msra.mxu0 %v55
    %130 = vmatprep.subr.mxu0 0.0
    %131 = vmatpush1.msra.mxu0 %v56
    %132 = vmatprep.mubr.f32.mxu0 %v65
    %133 = vmatmul.mubr.f32.gmra.mrb[0].mxu0 %v64
    %v134 = vpop.f32.mrb[0].mxu0
    %v135 = vadd.f32 0.0, %v134
    %v136 = vpop.f32.mrb[0].mxu0
    %137 = vdwg.mxu0
    %vm138 = vcmask 58368
    %v139 = vsel %vm138, %v135, -inf
    %140 = vmax.xlane.f32.xlu0 %v139
    %v141 = vpop.xlane.xlu0 %140
    %v142 = vsub.f32 %v135, %v141
    %v143 = vmul.f32 %v142, 1.442695
    %v144 = vpow.pop %v143
    %v145 = vsel %vm138, %v144, 0.0
    %146 = vadd.xlane.f32.xlu0 %v145
    %v147 = vpop.xlane.xlu0 %146
    %v148 = vrcp.pop %v147
    %v149 = vmul.f32 %v144, %v148
    %v150 = vld [vmem:[%s4] sm:$0xff]
    %v151 = vld [vmem:[%s4 + $0x8] sm:$0xff]
    %vm152 = vcmask 64512
    %v154 = vsel %vm152, %v149, 0
    %156 = vmatprep.subr.mxu0 %v151
    %157 = vmatpush1.msra.mxu0 %v150
    %158 = vmatprep.subr.mxu0 0.0
    %159 = vmatpush1.msra.mxu0 0.0
    %160 = vmatprep.subr.mxu0 0.0
    %161 = vmatpush1.msra.mxu0 0.0
    %162 = vmatprep.subr.mxu0 0.0
    %163 = vmatpush1.msra.mxu0 0.0
    %164 = vmatprep.subr.mxu0 0.0
    %165 = vmatpush1.msra.mxu0 0.0
    %166 = vmatprep.subr.mxu0 0.0
    %167 = vmatpush1.msra.mxu0 0.0
    %168 = vmatprep.subr.mxu0 0.0
    %169 = vmatpush1.msra.mxu0 0.0
    %170 = vmatprep.subr.mxu0 0.0
    %171 = vmatpush1.msra.mxu0 0.0
    %172 = vmatprep.subr.mxu0 0.0
    %173 = vmatpush1.msra.mxu0 0.0
    %174 = vmatprep.subr.mxu0 0.0
    %175 = vmatpush1.msra.mxu0 0.0
    %176 = vmatprep.subr.mxu0 0.0
    %177 = vmatpush1.msra.mxu0 0.0
    %178 = vmatprep.subr.mxu0 0.0
    %179 = vmatpush1.msra.mxu0 0.0
    %180 = vmatprep.subr.mxu0 0.0
    %181 = vmatpush1.msra.mxu0 0.0
    %182 = vmatprep.subr.mxu0 0.0
    %183 = vmatpush1.msra.mxu0 0.0
    %184 = vmatprep.subr.mxu0 0.0
    %185 = vmatpush1.msra.mxu0 0.0
    %186 = vmatprep.subr.mxu0 0.0
    %187 = vmatpush1.msra.mxu0 0.0
    %188 = vmatprep.subr.mxu0 0.0
    %189 = vmatpush1.msra.mxu0 0.0
    %190 = vmatprep.subr.mxu0 0.0
    %191 = vmatpush1.msra.mxu0 0.0
    %192 = vmatprep.subr.mxu0 0.0
    %193 = vmatpush1.msra.mxu0 0.0
    %194 = vmatprep.subr.mxu0 0.0
    %195 = vmatpush1.msra.mxu0 0.0
    %196 = vmatprep.subr.mxu0 0.0
    %197 = vmatpush1.msra.mxu0 0.0
    %198 = vmatprep.subr.mxu0 0.0
    %199 = vmatpush1.msra.mxu0 0.0
    %200 = vmatprep.subr.mxu0 0.0
    %201 = vmatpush1.msra.mxu0 0.0
    %202 = vmatprep.subr.mxu0 0.0
    %203 = vmatpush1.msra.mxu0 0.0
    %204 = vmatprep.subr.mxu0 0.0
    %205 = vmatpush1.msra.mxu0 0.0
    %206 = vmatprep.subr.mxu0 0.0
    %207 = vmatpush1.msra.mxu0 0.0
    %208 = vmatprep.subr.mxu0 0.0
    %209 = vmatpush1.msra.mxu0 0.0
    %210 = vmatprep.subr.mxu0 0.0
    %211 = vmatpush1.msra.mxu0 0.0
    %212 = vmatprep.subr.mxu0 0.0
    %213 = vmatpush1.msra.mxu0 0.0
    %214 = vmatprep.subr.mxu0 0.0
    %215 = vmatpush1.msra.mxu0 0.0
    %216 = vmatprep.subr.mxu0 0.0
    %217 = vmatpush1.msra.mxu0 0.0
    %218 = vmatprep.subr.mxu0 0.0
    %219 = vmatpush1.msra.mxu0 0.0
    %220 = vmatprep.mubr.f32.mxu0 0.0
    %221 = vmatmul.mubr.f32.gmra.mrb[0].mxu0 %v154
    %v222 = vpop.f32.mrb[0].mxu0
    %v223 = vadd.f32 0.0, %v222
    %v224 = vpop.f32.mrb[0].mxu0
    %v225 = vadd.f32 0.0, %v224
    %226 = vdwg.mxu0
    %v229 = vunpack.c.l.s4 1983009808
    %v230 = vunpack.c.0.s8 %v229
    %v231 = vlaneseq
    %v232 = vshrl.u32 %v231, 7
    %v233 = vsub.s32 %v230, %v232
    %v234 = vrot.slane %v23, %v233
    %v235 = vcombine.high %v234, %v234
    %v238 = vmul.f32 %v223, %v234
    %v239 = vmul.f32 %v225, %v235
    %v242 = vcombine.low %v238, %v239
    %v244 = vunpack.c.l.s4 1983009808
    %v245 = vunpack.c.0.s8 %v244
    %v246 = vlaneseq
    %v247 = vshrl.u32 %v246, 7
    %v248 = vsub.s32 %v245, %v247
    %v249 = vrot.slane %v242, %v248
    %251 = vst [vmem:[#allocation2] sm:$0xf] %v249
    // Predicated region
    $region22: #{tpu_custom_call.1} parent=1 // pred_check
      _
    $region23: #{tpu_custom_call.1} parent=1 // pred_check_branch
      %253 = sbr.rel (0) target = $region25
    $region24: #{tpu_custom_call.1} parent=1 // pred_region
      %s255 = ssub.s32 64, 64
      %256 = vsyncadd [#allocation3], %s255
      %s258 = sshll.u32 [#allocation2], 4
      %s259 = int_to_ptr.vmem [resolvable:$true] %s258
      %261 = dma.vmem_to_hbm [thread:$0]  %s259, 64, %s5, [#allocation3]
    $region25: #{tpu_custom_call.1} parent=1 // pred_fallthru
      _
    // Predicated region
    $region26: #{tpu_custom_call.1} parent=1 // pred_check
      _
    $region27: #{tpu_custom_call.1} parent=1 // pred_check_branch
      %263 = sbr.rel (0) target = $region29
    $region28: #{tpu_custom_call.1} parent=1 // pred_region
      %264 = dma.done [#allocation3], 64
    $region29: #{tpu_custom_call.1} parent=1 // pred_fallthru
      _
    %265 = vsyncpa [#allocation3], 1

</llo_original>
